<compile_context>
chip_gen: v5e
topology: v5e:2x2
jax: 0.10.0
libtpu: 0.0.40
codegen_flags: <defaults>
</compile_context>

<pallas_src>
import math

import numpy as np
import jax
import jax.numpy as jnp
from jax.experimental import pallas as pl
from jax.experimental.pallas import tpu as pltpu


def _pe_constants(num_pos_feats, temperature, normalize, scale, maxH, maxW):
    """Host-side (numpy) precomputation of the tiny constant kernel inputs."""
    P = num_pos_feats
    # cumsum of ones along H / W  ->  1..maxH / 1..maxW  (f32, like the buffer)
    y = np.arange(1, maxH + 1, dtype=np.float32)
    x = np.arange(1, maxW + 1, dtype=np.float32)
    if normalize:
        eps = np.float32(1e-6)                        # f32 add, like the reference
        y = (y / (np.float32(maxH) + eps)) * np.float32(scale)
        x = (x / (np.float32(maxW) + eps)) * np.float32(scale)
    # Flattened spatial embeds over flat index s = h*maxW + w, stacked to (2, HW):
    # row 0 depends on h only (y embed), row 1 on w only (x embed).
    emb = np.stack([np.repeat(y, maxW), np.tile(x, maxH)], axis=0).astype(np.float32)
    # Per-channel constants (identical for the pos_y half and the pos_x half).
    d = np.arange(P, dtype=np.float64)
    dim_t = np.float64(temperature) ** (2.0 * np.floor(d / 2.0) / float(P))
    inv_dim_t = (1.0 / dim_t).astype(np.float32).reshape(P, 1)
    # cos(a) == sin(a + pi/2): even channels sin (phase 0), odd channels cos.
    phase = ((np.arange(P) % 2) * (np.pi / 2.0)).astype(np.float32).reshape(P, 1)
    return emb, inv_dim_t, phase


def _make_pe_kernel(P):
    """Single-invocation kernel: writes the full (2P, HW) lane-dense slab."""

    def kernel(emb_ref, inv_ref, ph_ref, o_ref):
        inv = inv_ref[...]                       # (P, 1)
        ph = ph_ref[...]                         # (P, 1)
        # Direct row-range stores (no concatenate, no where/select):
        #   channels [0, P)  = pos_y half, channels [P, 2P) = pos_x half.
        # One fused mul-add + one transcendental per output element.
        o_ref[0:P, :] = jnp.sin(emb_ref[0:1, :] * inv + ph).astype(o_ref.dtype)
        o_ref[P:2 * P, :] = jnp.sin(emb_ref[1:2, :] * inv + ph).astype(o_ref.dtype)

    return kernel


def _gen_pos_buffer_pallas(num_pos_feats, temperature, normalize, scale,
                           maxH, maxW, dtype=jnp.float32):
    """Runs the Pallas kernel once; returns the lane-dense (2P, maxH*maxW) slab."""
    P = num_pos_feats
    C = 2 * P
    HW = maxH * maxW
    emb, inv_dim_t, phase = _pe_constants(
        P, temperature, normalize, scale, maxH, maxW)

    flat = pl.pallas_call(
        _make_pe_kernel(P),
        out_shape=jax.ShapeDtypeStruct((C, HW), dtype),
        grid_spec=pltpu.PrefetchScalarGridSpec(
            num_scalar_prefetch=0,
            grid=(1,),
            in_specs=[
                pl.BlockSpec((2, HW), lambda i: (0, 0)),   # stacked y/x embeds
                pl.BlockSpec((P, 1), lambda i: (0, 0)),    # 1 / dim_t
                pl.BlockSpec((P, 1), lambda i: (0, 0)),    # phase (0 or pi/2)
            ],
            out_specs=pl.BlockSpec((C, HW), lambda i: (0, 0)),
        ),
        compiler_params=pltpu.CompilerParams(
            dimension_semantics=("arbitrary",)),
    )(jnp.asarray(emb), jnp.asarray(inv_dim_t), jnp.asarray(phase))
    return flat


class PositionEmbeddingSine:
    """JAX/Pallas equivalent of the PyTorch PositionEmbeddingSine module.

    The Pallas kernel runs exactly once, here in __init__ (mirroring the
    register_buffer in the PyTorch module).  __call__ only broadcasts the cached
    buffer over the batch dimension of the input.
    """

    def __init__(self, num_pos_feats=64, temperature=10000, normalize=False,
                 scale=None, maxH=30, maxW=30, dtype=jnp.float32):
        if scale is not None and normalize is False:
            raise ValueError('normalize should be True if scale is passed')
        if scale is None:
            scale = 2 * math.pi
        self.num_pos_feats = num_pos_feats
        self.temperature = temperature
        self.normalize = normalize
        self.scale = scale
        self.maxH = maxH
        self.maxW = maxW

        C = 2 * num_pos_feats
        # One-time Pallas call (off any per-step jit graph).
        self.pe_flat = jax.block_until_ready(_gen_pos_buffer_pallas(
            num_pos_feats, temperature, normalize, scale, maxH, maxW, dtype))
        # One-time reshape to the module's (1, C, maxH, maxW) buffer layout; any
        # relayout copy this triggers is paid once at construction, never per step.
        self.pe = jax.block_until_ready(
            self.pe_flat.reshape(C, maxH, maxW)[None])

    def __call__(self, x):
        # torch: self.pe.repeat((x.size(0), 1, 1, 1)) -- lazy broadcast here, so
        # under jit no B-fold copy of the buffer is materialized unless forced.
        B = x.shape[0]
        return jnp.broadcast_to(self.pe, (B,) + self.pe.shape[1:])


def _reference_pe(B, num_pos_feats, temperature, normalize, scale, maxH, maxW):
    """Pure-JAX reference mirroring the PyTorch buffer construction."""
    ones = jnp.ones((1, maxH, maxW), jnp.float32)
    y_embed = jnp.cumsum(ones, axis=1)
    x_embed = jnp.cumsum(ones, axis=2)
    if normalize:
        eps = 1e-6
        y_embed = y_embed / (y_embed[:, -1:, :] + eps) * scale
        x_embed = x_embed / (x_embed[:, :, -1:] + eps) * scale
    dim_t = jnp.arange(num_pos_feats, dtype=jnp.float32)
    dim_t = temperature ** (2 * jnp.floor(dim_t / 2) / num_pos_feats)
    pos_x = x_embed[:, :, :, None] / dim_t
    pos_y = y_embed[:, :, :, None] / dim_t
    pos_x = jnp.stack((jnp.sin(pos_x[:, :, :, 0::2]),
                       jnp.cos(pos_x[:, :, :, 1::2])), axis=4).reshape(
                           1, maxH, maxW, num_pos_feats)
    pos_y = jnp.stack((jnp.sin(pos_y[:, :, :, 0::2]),
                       jnp.cos(pos_y[:, :, :, 1::2])), axis=4).reshape(
                           1, maxH, maxW, num_pos_feats)
    pos = jnp.concatenate((pos_y, pos_x), axis=3).transpose(0, 3, 1, 2)
    return jnp.tile(pos, (B, 1, 1, 1))


if __name__ == "__main__":
    key = jax.random.PRNGKey(0)
    # Small shapes: batch=2, channels=4, spatial 16x16; PE config with
    # num_pos_feats=16, maxH=maxW=16 -> pe channels = 32.
    B, Cin, H, W = 2, 4, 16, 16
    num_pos_feats, maxH, maxW = 16, 16, 16
    x = jax.random.normal(key, (B, Cin, H, W), dtype=jnp.float32)

    # Normalized path (how RankSegDecoderHead instantiates the embedding).
    pe_norm = PositionEmbeddingSine(num_pos_feats=num_pos_feats,
                                    temperature=10000, normalize=True,
                                    maxH=maxH, maxW=maxW)
    out_n = jax.block_until_ready(pe_norm(x))
    ref_n = _reference_pe(B, num_pos_feats, 10000, True, 2 * math.pi,
                          maxH, maxW)
    assert out_n.shape == (B, 2 * num_pos_feats, maxH, maxW)
    assert jnp.allclose(out_n, ref_n, atol=1e-5, rtol=1e-5)

    # Under jit, the forward is just a (lazy) broadcast of the precomputed
    # buffer: the Pallas call is NOT in the per-step graph.
    out_j = jax.block_until_ready(jax.jit(pe_norm.__call__)(x))
    assert jnp.allclose(out_j, ref_n, atol=1e-5, rtol=1e-5)

    # Unnormalized path as well.
    pe_raw = PositionEmbeddingSine(num_pos_feats=num_pos_feats,
                                   temperature=10000, normalize=False,
                                   maxH=maxH, maxW=maxW)
    out_u = jax.block_until_ready(pe_raw(x))
    ref_u = _reference_pe(B, num_pos_feats, 10000, False, 2 * math.pi,
                          maxH, maxW)
    assert jnp.allclose(out_u, ref_u, atol=1e-5, rtol=1e-5)

    print("KERNEL_OK")
</pallas_src>

<mosaic_0001>
module attributes {stable_mosaic.version = 11 : i64} {
  func.func @kernel(%arg0: i32, %arg1: memref<2x256xf32, #tpu.memory_space<vmem>>, %arg2: memref<16x1xf32, #tpu.memory_space<vmem>>, %arg3: memref<16x1xf32, #tpu.memory_space<vmem>>, %arg4: memref<32x256xf32, #tpu.memory_space<vmem>>) attributes {dimension_semantics = [#tpu.dimension_semantics<arbitrary>], iteration_bounds = array<i64: 1>, scalar_prefetch = 0 : i64, scratch_operands = 0 : i64, tpu.core_type = #tpu.core_type<tc>, window_params = [{pipeline_mode = #tpu.pipeline_mode<synchronous>, transform_indices = @transform_0, window_bounds = array<i64: 2, 256>}, {pipeline_mode = #tpu.pipeline_mode<synchronous>, transform_indices = @transform_1, window_bounds = array<i64: 16, 1>}, {pipeline_mode = #tpu.pipeline_mode<synchronous>, transform_indices = @transform_2, window_bounds = array<i64: 16, 1>}, {pipeline_mode = #tpu.pipeline_mode<synchronous>, transform_indices = @transform_3, window_bounds = array<i64: 32, 256>}]} {
    %c0 = arith.constant 0 : index
    %c0_0 = arith.constant 0 : index
    %0 = vector.load %arg2[%c0, %c0_0] : memref<16x1xf32, #tpu.memory_space<vmem>>, vector<16x1xf32>
    %c0_1 = arith.constant 0 : index
    %c0_2 = arith.constant 0 : index
    %1 = vector.load %arg3[%c0_1, %c0_2] : memref<16x1xf32, #tpu.memory_space<vmem>>, vector<16x1xf32>
    %c0_3 = arith.constant 0 : index
    %c0_4 = arith.constant 0 : index
    %2 = vector.load %arg1[%c0_3, %c0_4] : memref<2x256xf32, #tpu.memory_space<vmem>>, vector<1x256xf32>
    %3 = vector.broadcast %2 : vector<1x256xf32> to vector<16x256xf32>
    %4 = vector.broadcast %0 : vector<16x1xf32> to vector<16x256xf32>
    %5 = arith.mulf %3, %4 : vector<16x256xf32>
    %6 = vector.broadcast %1 : vector<16x1xf32> to vector<16x256xf32>
    %7 = arith.addf %5, %6 : vector<16x256xf32>
    %8 = math.sin %7 : vector<16x256xf32>
    %c0_5 = arith.constant 0 : index
    %c0_6 = arith.constant 0 : index
    %9 = vector.load %arg4[%c0_5, %c0_6] : memref<32x256xf32, #tpu.memory_space<vmem>>, vector<16x256xf32>
    tpu.vector_store %arg4[%c0_5, %c0_6], %8 {strides = array<i32>} : memref<32x256xf32, #tpu.memory_space<vmem>>, vector<16x256xf32>,
    %c1 = arith.constant 1 : index
    %c0_7 = arith.constant 0 : index
    %10 = vector.load %arg1[%c1, %c0_7] : memref<2x256xf32, #tpu.memory_space<vmem>>, vector<1x256xf32>
    %11 = vector.broadcast %10 : vector<1x256xf32> to vector<16x256xf32>
    %12 = vector.broadcast %0 : vector<16x1xf32> to vector<16x256xf32>
    %13 = arith.mulf %11, %12 : vector<16x256xf32>
    %14 = vector.broadcast %1 : vector<16x1xf32> to vector<16x256xf32>
    %15 = arith.addf %13, %14 : vector<16x256xf32>
    %16 = math.sin %15 : vector<16x256xf32>
    %c16 = arith.constant 16 : index
    %c0_8 = arith.constant 0 : index
    %17 = vector.load %arg4[%c16, %c0_8] : memref<32x256xf32, #tpu.memory_space<vmem>>, vector<16x256xf32>
    tpu.vector_store %arg4[%c16, %c0_8], %16 {strides = array<i32>} : memref<32x256xf32, #tpu.memory_space<vmem>>, vector<16x256xf32>,
    return
  }
  func.func @transform_0(%arg0: i32) -> (i32, i32) {
    %c0_i32 = arith.constant 0 : i32
    %c0_i32_0 = arith.constant 0 : i32
    %c0_i32_1 = arith.constant 0 : i32
    return %c0_i32, %c0_i32_0 : i32, i32
  }
  func.func @transform_1(%arg0: i32) -> (i32, i32) {
    %c0_i32 = arith.constant 0 : i32
    %c0_i32_0 = arith.constant 0 : i32
    %c0_i32_1 = arith.constant 0 : i32
    return %c0_i32, %c0_i32_0 : i32, i32
  }
  func.func @transform_2(%arg0: i32) -> (i32, i32) {
    %c0_i32 = arith.constant 0 : i32
    %c0_i32_0 = arith.constant 0 : i32
    %c0_i32_1 = arith.constant 0 : i32
    return %c0_i32, %c0_i32_0 : i32, i32
  }
  func.func @transform_3(%arg0: i32) -> (i32, i32) {
    %c0_i32 = arith.constant 0 : i32
    %c0_i32_0 = arith.constant 0 : i32
    %c0_i32_1 = arith.constant 0 : i32
    return %c0_i32, %c0_i32_0 : i32, i32
  }
}

</mosaic_0001>

<llo_original>
// kernel: tpu_custom_call.1
$region0: #{tpu_custom_call.1}
  #allocation0 [shape = 'u32[]', space=smem, size = 0x4, offset = 0x4, fixed_abs, tag = 'smem constant byte address 0x4 - core index']
  #allocation1 [shape = 'u32[72,128]{1,0:T(1,128)}', space=vmem, size = 0x9000, scoped, tag = 'internal scratch']
  %s0 = inlined_call_operand.vmem [shape: f32[2,256], index: 0, kind: input, shape index: {}]
  %s1 = inlined_call_operand.vmem [shape: f32[16,1], index: 1, kind: input, shape index: {}]
  %s2 = inlined_call_operand.vmem [shape: f32[16,1], index: 2, kind: input, shape index: {}]
  %s3 = inlined_call_operand.hbm [shape: f32[32,256], index: 3, kind: output, shape index: {}]
  %s4 = sld [smem:[#allocation0]]
  $region22: #{tpu_custom_call.1} parent=0
    _
  %s6 = ssub.s32 1, %s4
  %s7 = scalar_select 0, %s6, %s4
  $region1: #{tpu_custom_call.1} parent=0
    #allocation2 [shape = 'u8[32768]{0}', space=vmem, size = 0x8000, scoped, tag = 'output window, operand 0, single buffered']
    #allocation3 [shape = 's32[1]{0}', space=sflag, size = 0x4, scoped, tag = 'scoped memory for tpu_custom_call.1']
    %8 = vsyncpa [#allocation3], 0
    // Predicated region
    $region2: #{tpu_custom_call.1} parent=1 // pred_check
      _
    $region3: #{tpu_custom_call.1} parent=1 // pred_check_branch
      %10 = sbr.rel (0) target = $region5
    $region4: #{tpu_custom_call.1} parent=1 // pred_region
      _
    $region5: #{tpu_custom_call.1} parent=1 // pred_fallthru
      _
    // Predicated region
    $region6: #{tpu_custom_call.1} parent=1 // pred_check
      _
    $region7: #{tpu_custom_call.1} parent=1 // pred_check_branch
      %12 = sbr.rel (0) target = $region9
    $region8: #{tpu_custom_call.1} parent=1 // pred_region
      _
    $region9: #{tpu_custom_call.1} parent=1 // pred_fallthru
      _
    // Predicated region
    $region10: #{tpu_custom_call.1} parent=1 // pred_check
      _
    $region11: #{tpu_custom_call.1} parent=1 // pred_check_branch
      %14 = sbr.rel (0) target = $region13
    $region12: #{tpu_custom_call.1} parent=1 // pred_region
      _
    $region13: #{tpu_custom_call.1} parent=1 // pred_fallthru
      _
    %v15 = vld [vmem:[%s1] sm:$0xff]
    %v16 = vld [vmem:[%s1 + $0x8] sm:$0xff]
    %v17 = vld [vmem:[%s2] sm:$0xff]
    %v18 = vld [vmem:[%s2 + $0x8] sm:$0xff]
    %v19 = vld [vmem:[%s0] ss:$2 sm:$0x3]
    %v21 = vperm.slane %v19, 0
    %v22 = vperm.slane %v19, 1
    %26 = vset.pattern.permute.xlu0 0
    %27 = vperm.xlu0 %26, %v15
    %v28 = vpop.permute.xlu0 %27
    %31 = vset.pattern.permute.xlu0 0
    %32 = vperm.xlu0 %31, %v16
    %v33 = vpop.permute.xlu0 %32
    %v35 = vmul.f32 %v21, %v28
    %v36 = vmul.f32 %v22, %v28
    %v37 = vmul.f32 %v21, %v33
    %v38 = vmul.f32 %v22, %v33
    %40 = vset.pattern.permute.xlu0 0
    %41 = vperm.xlu0 %40, %v17
    %v42 = vpop.permute.xlu0 %41
    %45 = vset.pattern.permute.xlu0 0
    %46 = vperm.xlu0 %45, %v18
    %v47 = vpop.permute.xlu0 %46
    %v49 = vadd.f32 %v35, %v42
    %v50 = vadd.f32 %v36, %v42
    %v51 = vadd.f32 %v37, %v47
    %v52 = vadd.f32 %v38, %v47
    %v53 = vand.u32 2147483647, %v49
    %vm54 = vcmp.le.f32.partialorder %v53, 0.7853982
    %vm55 = vcmp.lt.s32.totalorder %v49, 0
    %v56 = vand.u32 %v49, 2139095040
    %v57 = vshrl.u32 %v56, 23
    %v58 = vsub.s32 %v57, 127
    %v59 = vand.u32 2147483647, %v49
    %v60 = vand.u32 %v59, 8388607
    %v61 = vor.u32 %v60, 8388608
    %v62 = vsub.s32 0, %v61
    %v63 = vadd.s32 %v58, 1
    %vm64 = vcmp.gt.s32.totalorder %v63, 0
    %v65 = vsel %vm64, %v63, 0
    %v66 = vshrl.u32 %v65, 5
    %v67 = vand.u32 %v65, 31
    %v68 = vsub.s32 32, %v67
    %v69 = vshrl.u32 683565275, %v68
    %v70 = vshll.u32 683565275, %v67
    %v71 = vshrl.u32 2475754826, %v68
    %v72 = vor.u32 %v70, %v71
    %v73 = vshll.u32 2475754826, %v67
    %v74 = vshrl.u32 2131351028, %v68
    %v75 = vor.u32 %v73, %v74
    %v76 = vshll.u32 2131351028, %v67
    %v77 = vshrl.u32 2102212464, %v68
    %v78 = vor.u32 %v76, %v77
    %v79 = vshll.u32 2102212464, %v67
    %v80 = vshrl.u32 920167782, %v68
    %v81 = vor.u32 %v79, %v80
    %v82 = vshll.u32 920167782, %v67
    %v83 = vshrl.u32 1326507024, %v68
    %v84 = vor.u32 %v82, %v83
    %vm85 = vcmp.lt.s32.totalorder %v66, 1
    %vm86 = vcmp.lt.s32.totalorder %v66, 2
    %vm87 = vcmp.lt.s32.totalorder %v66, 3
    %vm88 = vcmp.lt.s32.totalorder %v66, 4
    %v89 = vsel %vm85, %v69, %v72
    %v90 = vsel %vm88, %v78, 2102212464
    %v91 = vsel %vm87, %v75, %v90
    %v92 = vsel %vm86, %v89, %v91
    %v93 = vsel %vm85, %v72, %v75
    %v94 = vsel %vm88, %v81, 920167782
    %v95 = vsel %vm87, %v78, %v94
    %v96 = vsel %vm86, %v93, %v95
    %v97 = vsel %vm85, %v75, %v78
    %v98 = vsel %vm88, %v84, 1326507024
    %v99 = vsel %vm87, %v81, %v98
    %v100 = vsel %vm86, %v97, %v99
    %v101 = vshll.u32 %v61, 8
    %v102 = vand.u32 %v101, 65535
    %v103 = vshrl.u32 %v101, 16
    %v104 = vand.u32 %v100, 65535
    %v105 = vshrl.u32 %v100, 16
    %v106 = vmul.u32 %v102, %v104
    %v107 = vmul.u32 %v102, %v105
    %v108 = vmul.u32 %v103, %v104
    %v109 = vmul.u32 %v103, %v105
    %v110 = vshll.u32 %v107, 16
    %v111 = vshrl.u32 %v107, 16
    %v112 = vshll.u32 %v108, 16
    %v113 = vshrl.u32 %v108, 16
    %vm114 = vc.u32 %v106, %v110
    %v115 = vsel %vm114, 1, 0
    %v116 = vadd.s32 %v106, %v110
    %v117 = vadd.s32 %v109, %v115
    %vm118 = vc.u32 %v116, %v112
    %v119 = vsel %vm118, 1, 0
    %v120 = vadd.s32 %v116, %v112
    %v121 = vadd.s32 %v117, %v119
    %v122 = vadd.s32 %v121, %v111
    %v123 = vadd.s32 %v122, %v113
    %v124 = vand.u32 %v101, 65535
    %v125 = vshrl.u32 %v101, 16
    %v126 = vand.u32 %v96, 65535
    %v127 = vshrl.u32 %v96, 16
    %v128 = vmul.u32 %v124, %v126
    %v129 = vmul.u32 %v124, %v127
    %v130 = vmul.u32 %v125, %v126
    %v131 = vmul.u32 %v125, %v127
    %v132 = vshll.u32 %v129, 16
    %v133 = vshrl.u32 %v129, 16
    %v134 = vshll.u32 %v130, 16
    %v135 = vshrl.u32 %v130, 16
    %vm136 = vc.u32 %v128, %v132
    %v137 = vsel %vm136, 1, 0
    %v138 = vadd.s32 %v128, %v132
    %v139 = vadd.s32 %v131, %v137
    %vm140 = vc.u32 %v138, %v134
    %v141 = vsel %vm140, 1, 0
    %v142 = vadd.s32 %v138, %v134
    %v143 = vadd.s32 %v139, %v141
    %v144 = vadd.s32 %v143, %v133
    %v145 = vadd.s32 %v144, %v135
    %v146 = vmul.u32 %v101, %v92
    %v147 = vadd.s32 %v123, %v142
    %vm148 = vc.u32 %v123, %v142
    %v149 = vadd.s32 %v145, 1
    %v150 = vsel %vm148, %v149, %v145
    %v151 = vadd.s32 %v146, %v150
    %v152 = vadd.s32 %v151, 536870912
    %v153 = vshrl.u32 %v152, 30
    %v154 = vshll.u32 %v153, 30
    %v155 = vsub.s32 %v151, %v154
    %vm156 = vcmp.lt.s32.totalorder %v155, 0
    %v157 = vsub.s32 0, %v155
    %v158 = vsel %vm156, %v157, %v155
    %v159 = vclz %v158
    %v160 = vsub.s32 %v159, 2
    %vm161 = vcmp.gt.s32.totalorder 0, %v160
    %v162 = vsel %vm161, 0, %v160
    %v163 = vsub.s32 32, %v162
    %v164 = vshll.u32 %v155, %v162
    %v165 = vshrl.u32 %v147, %v163
    %v166 = vor.u32 %v164, %v165
    %v167 = vsub.s32 4294967266, %v162
    %v168 = vadd.s32 %v167, 127
    %v169 = vshll.u32 %v168, 23
    %v170 = vor.u32 4788187, %v169
    %v171 = vand.u32 2147483647, %v170
    %v173 = vcvt.s32.f32 %v166
    %v174 = vmul.f32 %v173, %v171
    %v175 = vxor.u32 %v174, 2147483648
    %v176 = vsel %vm55, %v175, %v174
    %v177 = vsub.s32 4, %v153
    %v178 = vsel %vm55, %v177, %v153
    %v179 = vsel %vm54, %v49, %v176
    %v180 = vsel %vm54, 0, %v178
    %v181 = vmul.f32 %v179, %v179
    %v182 = vmul.f32 %v181, -0.001358992
    %v183 = vadd.f32 %v182, 0.041655596
    %v184 = vmul.f32 %v181, %v183
    %v185 = vadd.f32 %v184, -0.4999988
    %v186 = vmul.f32 %v181, %v185
    %v187 = vadd.f32 1.0, %v186
    %v188 = vmul.f32 %v179, %v179
    %v189 = vmul.f32 %v188, -0.00019511016
    %v190 = vadd.f32 %v189, 0.008332121
    %v191 = vmul.f32 %v188, %v190
    %v192 = vadd.f32 %v191, -0.16666654
    %v193 = vmul.f32 %v188, %v192
    %v194 = vadd.f32 %v193, 1.0
    %v195 = vmul.f32 %v194, %v179
    %vm196 = vweird.f32 %v49
    %v197 = vadd.s32 %v180, 3
    %v198 = vand.u32 %v197, 3
    %vm199 = vcmp.lt.s32.totalorder %v198, 2
    %vm200 = vcmp.eq.s32.totalorder %v198, 0
    %v201 = vxor.u32 %v195, 2147483648
    %v202 = vsel %vm200, %v187, %v201
    %vm203 = vcmp.eq.s32.totalorder %v198, 2
    %v204 = vxor.u32 %v187, 2147483648
    %v205 = vsel %vm203, %v204, %v195
    %v206 = vsel %vm199, %v202, %v205
    %v207 = vsel %vm196, nan, %v206
    %v208 = vand.u32 2147483647, %v50
    %vm209 = vcmp.le.f32.partialorder %v208, 0.7853982
    %vm210 = vcmp.lt.s32.totalorder %v50, 0
    %v211 = vand.u32 %v50, 2139095040
    %v212 = vshrl.u32 %v211, 23
    %v213 = vsub.s32 %v212, 127
    %v214 = vand.u32 2147483647, %v50
    %v215 = vand.u32 %v214, 8388607
    %v216 = vor.u32 %v215, 8388608
    %v217 = vsub.s32 0, %v216
    %v218 = vadd.s32 %v213, 1
    %vm219 = vcmp.gt.s32.totalorder %v218, 0
    %v220 = vsel %vm219, %v218, 0
    %v221 = vshrl.u32 %v220, 5
    %v222 = vand.u32 %v220, 31
    %v223 = vsub.s32 32, %v222
    %v224 = vshrl.u32 683565275, %v223
    %v225 = vshll.u32 683565275, %v222
    %v226 = vshrl.u32 2475754826, %v223
    %v227 = vor.u32 %v225, %v226
    %v228 = vshll.u32 2475754826, %v222
    %v229 = vshrl.u32 2131351028, %v223
    %v230 = vor.u32 %v228, %v229
    %v231 = vshll.u32 2131351028, %v222
    %v232 = vshrl.u32 2102212464, %v223
    %v233 = vor.u32 %v231, %v232
    %v234 = vshll.u32 2102212464, %v222
    %v235 = vshrl.u32 920167782, %v223
    %v236 = vor.u32 %v234, %v235
    %v237 = vshll.u32 920167782, %v222
    %v238 = vshrl.u32 1326507024, %v223
    %v239 = vor.u32 %v237, %v238
    %vm240 = vcmp.lt.s32.totalorder %v221, 1
    %vm241 = vcmp.lt.s32.totalorder %v221, 2
    %vm242 = vcmp.lt.s32.totalorder %v221, 3
    %vm243 = vcmp.lt.s32.totalorder %v221, 4
    %v244 = vsel %vm240, %v224, %v227
    %v245 = vsel %vm243, %v233, 2102212464
    %v246 = vsel %vm242, %v230, %v245
    %v247 = vsel %vm241, %v244, %v246
    %v248 = vsel %vm240, %v227, %v230
    %v249 = vsel %vm243, %v236, 920167782
    %v250 = vsel %vm242, %v233, %v249
    %v251 = vsel %vm241, %v248, %v250
    %v252 = vsel %vm240, %v230, %v233
    %v253 = vsel %vm243, %v239, 1326507024
    %v254 = vsel %vm242, %v236, %v253
    %v255 = vsel %vm241, %v252, %v254
    %v256 = vshll.u32 %v216, 8
    %v257 = vand.u32 %v256, 65535
    %v258 = vshrl.u32 %v256, 16
    %v259 = vand.u32 %v255, 65535
    %v260 = vshrl.u32 %v255, 16
    %v261 = vmul.u32 %v257, %v259
    %v262 = vmul.u32 %v257, %v260
    %v263 = vmul.u32 %v258, %v259
    %v264 = vmul.u32 %v258, %v260
    %v265 = vshll.u32 %v262, 16
    %v266 = vshrl.u32 %v262, 16
    %v267 = vshll.u32 %v263, 16
    %v268 = vshrl.u32 %v263, 16
    %vm269 = vc.u32 %v261, %v265
    %v270 = vsel %vm269, 1, 0
    %v271 = vadd.s32 %v261, %v265
    %v272 = vadd.s32 %v264, %v270
    %vm273 = vc.u32 %v271, %v267
    %v274 = vsel %vm273, 1, 0
    %v275 = vadd.s32 %v271, %v267
    %v276 = vadd.s32 %v272, %v274
    %v277 = vadd.s32 %v276, %v266
    %v278 = vadd.s32 %v277, %v268
    %v279 = vand.u32 %v256, 65535
    %v280 = vshrl.u32 %v256, 16
    %v281 = vand.u32 %v251, 65535
    %v282 = vshrl.u32 %v251, 16
    %v283 = vmul.u32 %v279, %v281
    %v284 = vmul.u32 %v279, %v282
    %v285 = vmul.u32 %v280, %v281
    %v286 = vmul.u32 %v280, %v282
    %v287 = vshll.u32 %v284, 16
    %v288 = vshrl.u32 %v284, 16
    %v289 = vshll.u32 %v285, 16
    %v290 = vshrl.u32 %v285, 16
    %vm291 = vc.u32 %v283, %v287
    %v292 = vsel %vm291, 1, 0
    %v293 = vadd.s32 %v283, %v287
    %v294 = vadd.s32 %v286, %v292
    %vm295 = vc.u32 %v293, %v289
    %v296 = vsel %vm295, 1, 0
    %v297 = vadd.s32 %v293, %v289
    %v298 = vadd.s32 %v294, %v296
    %v299 = vadd.s32 %v298, %v288
    %v300 = vadd.s32 %v299, %v290
    %v301 = vmul.u32 %v256, %v247
    %v302 = vadd.s32 %v278, %v297
    %vm303 = vc.u32 %v278, %v297
    %v304 = vadd.s32 %v300, 1
    %v305 = vsel %vm303, %v304, %v300
    %v306 = vadd.s32 %v301, %v305
    %v307 = vadd.s32 %v306, 536870912
    %v308 = vshrl.u32 %v307, 30
    %v309 = vshll.u32 %v308, 30
    %v310 = vsub.s32 %v306, %v309
    %vm311 = vcmp.lt.s32.totalorder %v310, 0
    %v312 = vsub.s32 0, %v310
    %v313 = vsel %vm311, %v312, %v310
    %v314 = vclz %v313
    %v315 = vsub.s32 %v314, 2
    %vm316 = vcmp.gt.s32.totalorder 0, %v315
    %v317 = vsel %vm316, 0, %v315
    %v318 = vsub.s32 32, %v317
    %v319 = vshll.u32 %v310, %v317
    %v320 = vshrl.u32 %v302, %v318
    %v321 = vor.u32 %v319, %v320
    %v322 = vsub.s32 4294967266, %v317
    %v323 = vadd.s32 %v322, 127
    %v324 = vshll.u32 %v323, 23
    %v325 = vor.u32 4788187, %v324
    %v326 = vand.u32 2147483647, %v325
    %v328 = vcvt.s32.f32 %v321
    %v329 = vmul.f32 %v328, %v326
    %v330 = vxor.u32 %v329, 2147483648
    %v331 = vsel %vm210, %v330, %v329
    %v332 = vsub.s32 4, %v308
    %v333 = vsel %vm210, %v332, %v308
    %v334 = vsel %vm209, %v50, %v331
    %v335 = vsel %vm209, 0, %v333
    %v336 = vmul.f32 %v334, %v334
    %v337 = vmul.f32 %v336, -0.001358992
    %v338 = vadd.f32 %v337, 0.041655596
    %v339 = vmul.f32 %v336, %v338
    %v340 = vadd.f32 %v339, -0.4999988
    %v341 = vmul.f32 %v336, %v340
    %v342 = vadd.f32 1.0, %v341
    %v343 = vmul.f32 %v334, %v334
    %v344 = vmul.f32 %v343, -0.00019511016
    %v345 = vadd.f32 %v344, 0.008332121
    %v346 = vmul.f32 %v343, %v345
    %v347 = vadd.f32 %v346, -0.16666654
    %v348 = vmul.f32 %v343, %v347
    %v349 = vadd.f32 %v348, 1.0
    %v350 = vmul.f32 %v349, %v334
    %vm351 = vweird.f32 %v50
    %v352 = vadd.s32 %v335, 3
    %v353 = vand.u32 %v352, 3
    %vm354 = vcmp.lt.s32.totalorder %v353, 2
    %vm355 = vcmp.eq.s32.totalorder %v353, 0
    %v356 = vxor.u32 %v350, 2147483648
    %v357 = vsel %vm355, %v342, %v356
    %vm358 = vcmp.eq.s32.totalorder %v353, 2
    %v359 = vxor.u32 %v342, 2147483648
    %v360 = vsel %vm358, %v359, %v350
    %v361 = vsel %vm354, %v357, %v360
    %v362 = vsel %vm351, nan, %v361
    %v363 = vand.u32 2147483647, %v51
    %vm364 = vcmp.le.f32.partialorder %v363, 0.7853982
    %vm365 = vcmp.lt.s32.totalorder %v51, 0
    %v366 = vand.u32 %v51, 2139095040
    %v367 = vshrl.u32 %v366, 23
    %v368 = vsub.s32 %v367, 127
    %v369 = vand.u32 2147483647, %v51
    %v370 = vand.u32 %v369, 8388607
    %v371 = vor.u32 %v370, 8388608
    %v372 = vsub.s32 0, %v371
    %v373 = vadd.s32 %v368, 1
    %vm374 = vcmp.gt.s32.totalorder %v373, 0
    %v375 = vsel %vm374, %v373, 0
    %v376 = vshrl.u32 %v375, 5
    %v377 = vand.u32 %v375, 31
    %v378 = vsub.s32 32, %v377
    %v379 = vshrl.u32 683565275, %v378
    %v380 = vshll.u32 683565275, %v377
    %v381 = vshrl.u32 2475754826, %v378
    %v382 = vor.u32 %v380, %v381
    %v383 = vshll.u32 2475754826, %v377
    %v384 = vshrl.u32 2131351028, %v378
    %v385 = vor.u32 %v383, %v384
    %v386 = vshll.u32 2131351028, %v377
    %v387 = vshrl.u32 2102212464, %v378
    %v388 = vor.u32 %v386, %v387
    %v389 = vshll.u32 2102212464, %v377
    %v390 = vshrl.u32 920167782, %v378
    %v391 = vor.u32 %v389, %v390
    %v392 = vshll.u32 920167782, %v377
    %v393 = vshrl.u32 1326507024, %v378
    %v394 = vor.u32 %v392, %v393
    %vm395 = vcmp.lt.s32.totalorder %v376, 1
    %vm396 = vcmp.lt.s32.totalorder %v376, 2
    %vm397 = vcmp.lt.s32.totalorder %v376, 3
    %vm398 = vcmp.lt.s32.totalorder %v376, 4
    %v399 = vsel %vm395, %v379, %v382
    %v400 = vsel %vm398, %v388, 2102212464
    %v401 = vsel %vm397, %v385, %v400
    %v402 = vsel %vm396, %v399, %v401
    %v403 = vsel %vm395, %v382, %v385
    %v404 = vsel %vm398, %v391, 920167782
    %v405 = vsel %vm397, %v388, %v404
    %v406 = vsel %vm396, %v403, %v405
    %v407 = vsel %vm395, %v385, %v388
    %v408 = vsel %vm398, %v394, 1326507024
    %v409 = vsel %vm397, %v391, %v408
    %v410 = vsel %vm396, %v407, %v409
    %v411 = vshll.u32 %v371, 8
    %v412 = vand.u32 %v411, 65535
    %v413 = vshrl.u32 %v411, 16
    %v414 = vand.u32 %v410, 65535
    %v415 = vshrl.u32 %v410, 16
    %v416 = vmul.u32 %v412, %v414
    %v417 = vmul.u32 %v412, %v415
    %v418 = vmul.u32 %v413, %v414
    %v419 = vmul.u32 %v413, %v415
    %v420 = vshll.u32 %v417, 16
    %v421 = vshrl.u32 %v417, 16
    %v422 = vshll.u32 %v418, 16
    %v423 = vshrl.u32 %v418, 16
    %vm424 = vc.u32 %v416, %v420
    %v425 = vsel %vm424, 1, 0
    %v426 = vadd.s32 %v416, %v420
    %v427 = vadd.s32 %v419, %v425
    %vm428 = vc.u32 %v426, %v422
    %v429 = vsel %vm428, 1, 0
    %v430 = vadd.s32 %v426, %v422
    %v431 = vadd.s32 %v427, %v429
    %v432 = vadd.s32 %v431, %v421
    %v433 = vadd.s32 %v432, %v423
    %v434 = vand.u32 %v411, 65535
    %v435 = vshrl.u32 %v411, 16
    %v436 = vand.u32 %v406, 65535
    %v437 = vshrl.u32 %v406, 16
    %v438 = vmul.u32 %v434, %v436
    %v439 = vmul.u32 %v434, %v437
    %v440 = vmul.u32 %v435, %v436
    %v441 = vmul.u32 %v435, %v437
    %v442 = vshll.u32 %v439, 16
    %v443 = vshrl.u32 %v439, 16
    %v444 = vshll.u32 %v440, 16
    %v445 = vshrl.u32 %v440, 16
    %vm446 = vc.u32 %v438, %v442
    %v447 = vsel %vm446, 1, 0
    %v448 = vadd.s32 %v438, %v442
    %v449 = vadd.s32 %v441, %v447
    %vm450 = vc.u32 %v448, %v444
    %v451 = vsel %vm450, 1, 0
    %v452 = vadd.s32 %v448, %v444
    %v453 = vadd.s32 %v449, %v451
    %v454 = vadd.s32 %v453, %v443
    %v455 = vadd.s32 %v454, %v445
    %v456 = vmul.u32 %v411, %v402
    %v457 = vadd.s32 %v433, %v452
    %vm458 = vc.u32 %v433, %v452
    %v459 = vadd.s32 %v455, 1
    %v460 = vsel %vm458, %v459, %v455
    %v461 = vadd.s32 %v456, %v460
    %v462 = vadd.s32 %v461, 536870912
    %v463 = vshrl.u32 %v462, 30
    %v464 = vshll.u32 %v463, 30
    %v465 = vsub.s32 %v461, %v464
    %vm466 = vcmp.lt.s32.totalorder %v465, 0
    %v467 = vsub.s32 0, %v465
    %v468 = vsel %vm466, %v467, %v465
    %v469 = vclz %v468
    %v470 = vsub.s32 %v469, 2
    %vm471 = vcmp.gt.s32.totalorder 0, %v470
    %v472 = vsel %vm471, 0, %v470
    %v473 = vsub.s32 32, %v472
    %v474 = vshll.u32 %v465, %v472
    %v475 = vshrl.u32 %v457, %v473
    %v476 = vor.u32 %v474, %v475
    %v477 = vsub.s32 4294967266, %v472
    %v478 = vadd.s32 %v477, 127
    %v479 = vshll.u32 %v478, 23
    %v480 = vor.u32 4788187, %v479
    %v481 = vand.u32 2147483647, %v480
    %v483 = vcvt.s32.f32 %v476
    %v484 = vmul.f32 %v483, %v481
    %v485 = vxor.u32 %v484, 2147483648
    %v486 = vsel %vm365, %v485, %v484
    %v487 = vsub.s32 4, %v463
    %v488 = vsel %vm365, %v487, %v463
    %v489 = vsel %vm364, %v51, %v486
    %v490 = vsel %vm364, 0, %v488
    %v491 = vmul.f32 %v489, %v489
    %v492 = vmul.f32 %v491, -0.001358992
    %v493 = vadd.f32 %v492, 0.041655596
    %v494 = vmul.f32 %v491, %v493
    %v495 = vadd.f32 %v494, -0.4999988
    %v496 = vmul.f32 %v491, %v495
    %v497 = vadd.f32 1.0, %v496
    %v498 = vmul.f32 %v489, %v489
    %v499 = vmul.f32 %v498, -0.00019511016
    %v500 = vadd.f32 %v499, 0.008332121
    %v501 = vmul.f32 %v498, %v500
    %v502 = vadd.f32 %v501, -0.16666654
    %v503 = vmul.f32 %v498, %v502
    %v504 = vadd.f32 %v503, 1.0
    %v505 = vmul.f32 %v504, %v489
    %vm506 = vweird.f32 %v51
    %v507 = vadd.s32 %v490, 3
    %v508 = vand.u32 %v507, 3
    %vm509 = vcmp.lt.s32.totalorder %v508, 2
    %vm510 = vcmp.eq.s32.totalorder %v508, 0
    %v511 = vxor.u32 %v505, 2147483648
    %v512 = vsel %vm510, %v497, %v511
    %vm513 = vcmp.eq.s32.totalorder %v508, 2
    %v514 = vxor.u32 %v497, 2147483648
    %v515 = vsel %vm513, %v514, %v505
    %v516 = vsel %vm509, %v512, %v515
    %v517 = vsel %vm506, nan, %v516
    %v518 = vand.u32 2147483647, %v52
    %vm519 = vcmp.le.f32.partialorder %v518, 0.7853982
    %vm520 = vcmp.lt.s32.totalorder %v52, 0
    %v521 = vand.u32 %v52, 2139095040
    %v522 = vshrl.u32 %v521, 23
    %v523 = vsub.s32 %v522, 127
    %v524 = vand.u32 2147483647, %v52
    %v525 = vand.u32 %v524, 8388607
    %v526 = vor.u32 %v525, 8388608
    %v527 = vsub.s32 0, %v526
    %v528 = vadd.s32 %v523, 1
    %vm529 = vcmp.gt.s32.totalorder %v528, 0
    %v530 = vsel %vm529, %v528, 0
    %v531 = vshrl.u32 %v530, 5
    %v532 = vand.u32 %v530, 31
    %v533 = vsub.s32 32, %v532
    %v534 = vshrl.u32 683565275, %v533
    %v535 = vshll.u32 683565275, %v532
    %v536 = vshrl.u32 2475754826, %v533
    %v537 = vor.u32 %v535, %v536
    %v538 = vshll.u32 2475754826, %v532
    %v539 = vshrl.u32 2131351028, %v533
    %v540 = vor.u32 %v538, %v539
    %v541 = vshll.u32 2131351028, %v532
    %v542 = vshrl.u32 2102212464, %v533
    %v543 = vor.u32 %v541, %v542
    %v544 = vshll.u32 2102212464, %v532
    %v545 = vshrl.u32 920167782, %v533
    %v546 = vor.u32 %v544, %v545
    %v547 = vshll.u32 920167782, %v532
    %v548 = vshrl.u32 1326507024, %v533
    %v549 = vor.u32 %v547, %v548
    %vm550 = vcmp.lt.s32.totalorder %v531, 1
    %vm551 = vcmp.lt.s32.totalorder %v531, 2
    %vm552 = vcmp.lt.s32.totalorder %v531, 3
    %vm553 = vcmp.lt.s32.totalorder %v531, 4
    %v554 = vsel %vm550, %v534, %v537
    %v555 = vsel %vm553, %v543, 2102212464
    %v556 = vsel %vm552, %v540, %v555
    %v557 = vsel %vm551, %v554, %v556
    %v558 = vsel %vm550, %v537, %v540
    %v559 = vsel %vm553, %v546, 920167782
    %v560 = vsel %vm552, %v543, %v559
    %v561 = vsel %vm551, %v558, %v560
    %v562 = vsel %vm550, %v540, %v543
    %v563 = vsel %vm553, %v549, 1326507024
    %v564 = vsel %vm552, %v546, %v563
    %v565 = vsel %vm551, %v562, %v564
    %v566 = vshll.u32 %v526, 8
    %v567 = vand.u32 %v566, 65535
    %v568 = vshrl.u32 %v566, 16
    %v569 = vand.u32 %v565, 65535
    %v570 = vshrl.u32 %v565, 16
    %v571 = vmul.u32 %v567, %v569
    %v572 = vmul.u32 %v567, %v570
    %v573 = vmul.u32 %v568, %v569
    %v574 = vmul.u32 %v568, %v570
    %v575 = vshll.u32 %v572, 16
    %v576 = vshrl.u32 %v572, 16
    %v577 = vshll.u32 %v573, 16
    %v578 = vshrl.u32 %v573, 16
    %vm579 = vc.u32 %v571, %v575
    %v580 = vsel %vm579, 1, 0
    %v581 = vadd.s32 %v571, %v575
    %v582 = vadd.s32 %v574, %v580
    %vm583 = vc.u32 %v581, %v577
    %v584 = vsel %vm583, 1, 0
    %v585 = vadd.s32 %v581, %v577
    %v586 = vadd.s32 %v582, %v584
    %v587 = vadd.s32 %v586, %v576
    %v588 = vadd.s32 %v587, %v578
    %v589 = vand.u32 %v566, 65535
    %v590 = vshrl.u32 %v566, 16
    %v591 = vand.u32 %v561, 65535
    %v592 = vshrl.u32 %v561, 16
    %v593 = vmul.u32 %v589, %v591
    %v594 = vmul.u32 %v589, %v592
    %v595 = vmul.u32 %v590, %v591
    %v596 = vmul.u32 %v590, %v592
    %v597 = vshll.u32 %v594, 16
    %v598 = vshrl.u32 %v594, 16
    %v599 = vshll.u32 %v595, 16
    %v600 = vshrl.u32 %v595, 16
    %vm601 = vc.u32 %v593, %v597
    %v602 = vsel %vm601, 1, 0
    %v603 = vadd.s32 %v593, %v597
    %v604 = vadd.s32 %v596, %v602
    %vm605 = vc.u32 %v603, %v599
    %v606 = vsel %vm605, 1, 0
    %v607 = vadd.s32 %v603, %v599
    %v608 = vadd.s32 %v604, %v606
    %v609 = vadd.s32 %v608, %v598
    %v610 = vadd.s32 %v609, %v600
    %v611 = vmul.u32 %v566, %v557
    %v612 = vadd.s32 %v588, %v607
    %vm613 = vc.u32 %v588, %v607
    %v614 = vadd.s32 %v610, 1
    %v615 = vsel %vm613, %v614, %v610
    %v616 = vadd.s32 %v611, %v615
    %v617 = vadd.s32 %v616, 536870912
    %v618 = vshrl.u32 %v617, 30
    %v619 = vshll.u32 %v618, 30
    %v620 = vsub.s32 %v616, %v619
    %vm621 = vcmp.lt.s32.totalorder %v620, 0
    %v622 = vsub.s32 0, %v620
    %v623 = vsel %vm621, %v622, %v620
    %v624 = vclz %v623
    %v625 = vsub.s32 %v624, 2
    %vm626 = vcmp.gt.s32.totalorder 0, %v625
    %v627 = vsel %vm626, 0, %v625
    %v628 = vsub.s32 32, %v627
    %v629 = vshll.u32 %v620, %v627
    %v630 = vshrl.u32 %v612, %v628
    %v631 = vor.u32 %v629, %v630
    %v632 = vsub.s32 4294967266, %v627
    %v633 = vadd.s32 %v632, 127
    %v634 = vshll.u32 %v633, 23
    %v635 = vor.u32 4788187, %v634
    %v636 = vand.u32 2147483647, %v635
    %v638 = vcvt.s32.f32 %v631
    %v639 = vmul.f32 %v638, %v636
    %v640 = vxor.u32 %v639, 2147483648
    %v641 = vsel %vm520, %v640, %v639
    %v642 = vsub.s32 4, %v618
    %v643 = vsel %vm520, %v642, %v618
    %v644 = vsel %vm519, %v52, %v641
    %v645 = vsel %vm519, 0, %v643
    %v646 = vmul.f32 %v644, %v644
    %v647 = vmul.f32 %v646, -0.001358992
    %v648 = vadd.f32 %v647, 0.041655596
    %v649 = vmul.f32 %v646, %v648
    %v650 = vadd.f32 %v649, -0.4999988
    %v651 = vmul.f32 %v646, %v650
    %v652 = vadd.f32 1.0, %v651
    %v653 = vmul.f32 %v644, %v644
    %v654 = vmul.f32 %v653, -0.00019511016
    %v655 = vadd.f32 %v654, 0.008332121
    %v656 = vmul.f32 %v653, %v655
    %v657 = vadd.f32 %v656, -0.16666654
    %v658 = vmul.f32 %v653, %v657
    %v659 = vadd.f32 %v658, 1.0
    %v660 = vmul.f32 %v659, %v644
    %vm661 = vweird.f32 %v52
    %v662 = vadd.s32 %v645, 3
    %v663 = vand.u32 %v662, 3
    %vm664 = vcmp.lt.s32.totalorder %v663, 2
    %vm665 = vcmp.eq.s32.totalorder %v663, 0
    %v666 = vxor.u32 %v660, 2147483648
    %v667 = vsel %vm665, %v652, %v666
    %vm668 = vcmp.eq.s32.totalorder %v663, 2
    %v669 = vxor.u32 %v652, 2147483648
    %v670 = vsel %vm668, %v669, %v660
    %v671 = vsel %vm664, %v667, %v670
    %v672 = vsel %vm661, nan, %v671
    %673 = vst [vmem:[#allocation2] sm:$0xff] %v207
    %674 = vst [vmem:[#allocation2 + $0x8] sm:$0xff] %v362
    %675 = vst [vmem:[#allocation2 + $0x10] sm:$0xff] %v517
    %676 = vst [vmem:[#allocation2 + $0x18] sm:$0xff] %v672
    %s677 = scalar_lea.vmem %s0, 1
    %v678 = vld [vmem:[%s677] ss:$2 sm:$0x3]
    %v680 = vperm.slane %v678, 0
    %v681 = vperm.slane %v678, 1
    %v684 = vmul.f32 %v680, %v28
    %v685 = vmul.f32 %v681, %v28
    %v686 = vmul.f32 %v680, %v33
    %v687 = vmul.f32 %v681, %v33
    %v688 = vadd.f32 %v684, %v42
    %v689 = vadd.f32 %v685, %v42
    %v690 = vadd.f32 %v686, %v47
    %v691 = vadd.f32 %v687, %v47
    %v692 = vand.u32 2147483647, %v688
    %vm693 = vcmp.le.f32.partialorder %v692, 0.7853982
    %vm694 = vcmp.lt.s32.totalorder %v688, 0
    %v695 = vand.u32 %v688, 2139095040
    %v696 = vshrl.u32 %v695, 23
    %v697 = vsub.s32 %v696, 127
    %v698 = vand.u32 2147483647, %v688
    %v699 = vand.u32 %v698, 8388607
    %v700 = vor.u32 %v699, 8388608
    %v701 = vsub.s32 0, %v700
    %v702 = vadd.s32 %v697, 1
    %vm703 = vcmp.gt.s32.totalorder %v702, 0
    %v704 = vsel %vm703, %v702, 0
    %v705 = vshrl.u32 %v704, 5
    %v706 = vand.u32 %v704, 31
    %v707 = vsub.s32 32, %v706
    %v708 = vshrl.u32 683565275, %v707
    %v709 = vshll.u32 683565275, %v706
    %v710 = vshrl.u32 2475754826, %v707
    %v711 = vor.u32 %v709, %v710
    %v712 = vshll.u32 2475754826, %v706
    %v713 = vshrl.u32 2131351028, %v707
    %v714 = vor.u32 %v712, %v713
    %v715 = vshll.u32 2131351028, %v706
    %v716 = vshrl.u32 2102212464, %v707
    %v717 = vor.u32 %v715, %v716
    %v718 = vshll.u32 2102212464, %v706
    %v719 = vshrl.u32 920167782, %v707
    %v720 = vor.u32 %v718, %v719
    %v721 = vshll.u32 920167782, %v706
    %v722 = vshrl.u32 1326507024, %v707
    %v723 = vor.u32 %v721, %v722
    %vm724 = vcmp.lt.s32.totalorder %v705, 1
    %vm725 = vcmp.lt.s32.totalorder %v705, 2
    %vm726 = vcmp.lt.s32.totalorder %v705, 3
    %vm727 = vcmp.lt.s32.totalorder %v705, 4
    %v728 = vsel %vm724, %v708, %v711
    %v729 = vsel %vm727, %v717, 2102212464
    %v730 = vsel %vm726, %v714, %v729
    %v731 = vsel %vm725, %v728, %v730
    %v732 = vsel %vm724, %v711, %v714
    %v733 = vsel %vm727, %v720, 920167782
    %v734 = vsel %vm726, %v717, %v733
    %v735 = vsel %vm725, %v732, %v734
    %v736 = vsel %vm724, %v714, %v717
    %v737 = vsel %vm727, %v723, 1326507024
    %v738 = vsel %vm726, %v720, %v737
    %v739 = vsel %vm725, %v736, %v738
    %v740 = vshll.u32 %v700, 8
    %v741 = vand.u32 %v740, 65535
    %v742 = vshrl.u32 %v740, 16
    %v743 = vand.u32 %v739, 65535
    %v744 = vshrl.u32 %v739, 16
    %v745 = vmul.u32 %v741, %v743
    %v746 = vmul.u32 %v741, %v744
    %v747 = vmul.u32 %v742, %v743
    %v748 = vmul.u32 %v742, %v744
    %v749 = vshll.u32 %v746, 16
    %v750 = vshrl.u32 %v746, 16
    %v751 = vshll.u32 %v747, 16
    %v752 = vshrl.u32 %v747, 16
    %vm753 = vc.u32 %v745, %v749
    %v754 = vsel %vm753, 1, 0
    %v755 = vadd.s32 %v745, %v749
    %v756 = vadd.s32 %v748, %v754
    %vm757 = vc.u32 %v755, %v751
    %v758 = vsel %vm757, 1, 0
    %v759 = vadd.s32 %v755, %v751
    %v760 = vadd.s32 %v756, %v758
    %v761 = vadd.s32 %v760, %v750
    %v762 = vadd.s32 %v761, %v752
    %v763 = vand.u32 %v740, 65535
    %v764 = vshrl.u32 %v740, 16
    %v765 = vand.u32 %v735, 65535
    %v766 = vshrl.u32 %v735, 16
    %v767 = vmul.u32 %v763, %v765
    %v768 = vmul.u32 %v763, %v766
    %v769 = vmul.u32 %v764, %v765
    %v770 = vmul.u32 %v764, %v766
    %v771 = vshll.u32 %v768, 16
    %v772 = vshrl.u32 %v768, 16
    %v773 = vshll.u32 %v769, 16
    %v774 = vshrl.u32 %v769, 16
    %vm775 = vc.u32 %v767, %v771
    %v776 = vsel %vm775, 1, 0
    %v777 = vadd.s32 %v767, %v771
    %v778 = vadd.s32 %v770, %v776
    %vm779 = vc.u32 %v777, %v773
    %v780 = vsel %vm779, 1, 0
    %v781 = vadd.s32 %v777, %v773
    %v782 = vadd.s32 %v778, %v780
    %v783 = vadd.s32 %v782, %v772
    %v784 = vadd.s32 %v783, %v774
    %v785 = vmul.u32 %v740, %v731
    %v786 = vadd.s32 %v762, %v781
    %vm787 = vc.u32 %v762, %v781
    %v788 = vadd.s32 %v784, 1
    %v789 = vsel %vm787, %v788, %v784
    %v790 = vadd.s32 %v785, %v789
    %v791 = vadd.s32 %v790, 536870912
    %v792 = vshrl.u32 %v791, 30
    %v793 = vshll.u32 %v792, 30
    %v794 = vsub.s32 %v790, %v793
    %vm795 = vcmp.lt.s32.totalorder %v794, 0
    %v796 = vsub.s32 0, %v794
    %v797 = vsel %vm795, %v796, %v794
    %v798 = vclz %v797
    %v799 = vsub.s32 %v798, 2
    %vm800 = vcmp.gt.s32.totalorder 0, %v799
    %v801 = vsel %vm800, 0, %v799
    %v802 = vsub.s32 32, %v801
    %v803 = vshll.u32 %v794, %v801
    %v804 = vshrl.u32 %v786, %v802
    %v805 = vor.u32 %v803, %v804
    %v806 = vsub.s32 4294967266, %v801
    %v807 = vadd.s32 %v806, 127
    %v808 = vshll.u32 %v807, 23
    %v809 = vor.u32 4788187, %v808
    %v810 = vand.u32 2147483647, %v809
    %v812 = vcvt.s32.f32 %v805
    %v813 = vmul.f32 %v812, %v810
    %v814 = vxor.u32 %v813, 2147483648
    %v815 = vsel %vm694, %v814, %v813
    %v816 = vsub.s32 4, %v792
    %v817 = vsel %vm694, %v816, %v792
    %v818 = vsel %vm693, %v688, %v815
    %v819 = vsel %vm693, 0, %v817
    %v820 = vmul.f32 %v818, %v818
    %v821 = vmul.f32 %v820, -0.001358992
    %v822 = vadd.f32 %v821, 0.041655596
    %v823 = vmul.f32 %v820, %v822
    %v824 = vadd.f32 %v823, -0.4999988
    %v825 = vmul.f32 %v820, %v824
    %v826 = vadd.f32 1.0, %v825
    %v827 = vmul.f32 %v818, %v818
    %v828 = vmul.f32 %v827, -0.00019511016
    %v829 = vadd.f32 %v828, 0.008332121
    %v830 = vmul.f32 %v827, %v829
    %v831 = vadd.f32 %v830, -0.16666654
    %v832 = vmul.f32 %v827, %v831
    %v833 = vadd.f32 %v832, 1.0
    %v834 = vmul.f32 %v833, %v818
    %vm835 = vweird.f32 %v688
    %v836 = vadd.s32 %v819, 3
    %v837 = vand.u32 %v836, 3
    %vm838 = vcmp.lt.s32.totalorder %v837, 2
    %vm839 = vcmp.eq.s32.totalorder %v837, 0
    %v840 = vxor.u32 %v834, 2147483648
    %v841 = vsel %vm839, %v826, %v840
    %vm842 = vcmp.eq.s32.totalorder %v837, 2
    %v843 = vxor.u32 %v826, 2147483648
    %v844 = vsel %vm842, %v843, %v834
    %v845 = vsel %vm838, %v841, %v844
    %v846 = vsel %vm835, nan, %v845
    %v847 = vand.u32 2147483647, %v689
    %vm848 = vcmp.le.f32.partialorder %v847, 0.7853982
    %vm849 = vcmp.lt.s32.totalorder %v689, 0
    %v850 = vand.u32 %v689, 2139095040
    %v851 = vshrl.u32 %v850, 23
    %v852 = vsub.s32 %v851, 127
    %v853 = vand.u32 2147483647, %v689
    %v854 = vand.u32 %v853, 8388607
    %v855 = vor.u32 %v854, 8388608
    %v856 = vsub.s32 0, %v855
    %v857 = vadd.s32 %v852, 1
    %vm858 = vcmp.gt.s32.totalorder %v857, 0
    %v859 = vsel %vm858, %v857, 0
    %v860 = vshrl.u32 %v859, 5
    %v861 = vand.u32 %v859, 31
    %v862 = vsub.s32 32, %v861
    %v863 = vshrl.u32 683565275, %v862
    %v864 = vshll.u32 683565275, %v861
    %v865 = vshrl.u32 2475754826, %v862
    %v866 = vor.u32 %v864, %v865
    %v867 = vshll.u32 2475754826, %v861
    %v868 = vshrl.u32 2131351028, %v862
    %v869 = vor.u32 %v867, %v868
    %v870 = vshll.u32 2131351028, %v861
    %v871 = vshrl.u32 2102212464, %v862
    %v872 = vor.u32 %v870, %v871
    %v873 = vshll.u32 2102212464, %v861
    %v874 = vshrl.u32 920167782, %v862
    %v875 = vor.u32 %v873, %v874
    %v876 = vshll.u32 920167782, %v861
    %v877 = vshrl.u32 1326507024, %v862
    %v878 = vor.u32 %v876, %v877
    %vm879 = vcmp.lt.s32.totalorder %v860, 1
    %vm880 = vcmp.lt.s32.totalorder %v860, 2
    %vm881 = vcmp.lt.s32.totalorder %v860, 3
    %vm882 = vcmp.lt.s32.totalorder %v860, 4
    %v883 = vsel %vm879, %v863, %v866
    %v884 = vsel %vm882, %v872, 2102212464
    %v885 = vsel %vm881, %v869, %v884
    %v886 = vsel %vm880, %v883, %v885
    %v887 = vsel %vm879, %v866, %v869
    %v888 = vsel %vm882, %v875, 920167782
    %v889 = vsel %vm881, %v872, %v888
    %v890 = vsel %vm880, %v887, %v889
    %v891 = vsel %vm879, %v869, %v872
    %v892 = vsel %vm882, %v878, 1326507024
    %v893 = vsel %vm881, %v875, %v892
    %v894 = vsel %vm880, %v891, %v893
    %v895 = vshll.u32 %v855, 8
    %v896 = vand.u32 %v895, 65535
    %v897 = vshrl.u32 %v895, 16
    %v898 = vand.u32 %v894, 65535
    %v899 = vshrl.u32 %v894, 16
    %v900 = vmul.u32 %v896, %v898
    %v901 = vmul.u32 %v896, %v899
    %v902 = vmul.u32 %v897, %v898
    %v903 = vmul.u32 %v897, %v899
    %v904 = vshll.u32 %v901, 16
    %v905 = vshrl.u32 %v901, 16
    %v906 = vshll.u32 %v902, 16
    %v907 = vshrl.u32 %v902, 16
    %vm908 = vc.u32 %v900, %v904
    %v909 = vsel %vm908, 1, 0
    %v910 = vadd.s32 %v900, %v904
    %v911 = vadd.s32 %v903, %v909
    %vm912 = vc.u32 %v910, %v906
    %v913 = vsel %vm912, 1, 0
    %v914 = vadd.s32 %v910, %v906
    %v915 = vadd.s32 %v911, %v913
    %v916 = vadd.s32 %v915, %v905
    %v917 = vadd.s32 %v916, %v907
    %v918 = vand.u32 %v895, 65535
    %v919 = vshrl.u32 %v895, 16
    %v920 = vand.u32 %v890, 65535
    %v921 = vshrl.u32 %v890, 16
    %v922 = vmul.u32 %v918, %v920
    %v923 = vmul.u32 %v918, %v921
    %v924 = vmul.u32 %v919, %v920
    %v925 = vmul.u32 %v919, %v921
    %v926 = vshll.u32 %v923, 16
    %v927 = vshrl.u32 %v923, 16
    %v928 = vshll.u32 %v924, 16
    %v929 = vshrl.u32 %v924, 16
    %vm930 = vc.u32 %v922, %v926
    %v931 = vsel %vm930, 1, 0
    %v932 = vadd.s32 %v922, %v926
    %v933 = vadd.s32 %v925, %v931
    %vm934 = vc.u32 %v932, %v928
    %v935 = vsel %vm934, 1, 0
    %v936 = vadd.s32 %v932, %v928
    %v937 = vadd.s32 %v933, %v935
    %v938 = vadd.s32 %v937, %v927
    %v939 = vadd.s32 %v938, %v929
    %v940 = vmul.u32 %v895, %v886
    %v941 = vadd.s32 %v917, %v936
    %vm942 = vc.u32 %v917, %v936
    %v943 = vadd.s32 %v939, 1
    %v944 = vsel %vm942, %v943, %v939
    %v945 = vadd.s32 %v940, %v944
    %v946 = vadd.s32 %v945, 536870912
    %v947 = vshrl.u32 %v946, 30
    %v948 = vshll.u32 %v947, 30
    %v949 = vsub.s32 %v945, %v948
    %vm950 = vcmp.lt.s32.totalorder %v949, 0
    %v951 = vsub.s32 0, %v949
    %v952 = vsel %vm950, %v951, %v949
    %v953 = vclz %v952
    %v954 = vsub.s32 %v953, 2
    %vm955 = vcmp.gt.s32.totalorder 0, %v954
    %v956 = vsel %vm955, 0, %v954
    %v957 = vsub.s32 32, %v956
    %v958 = vshll.u32 %v949, %v956
    %v959 = vshrl.u32 %v941, %v957
    %v960 = vor.u32 %v958, %v959
    %v961 = vsub.s32 4294967266, %v956
    %v962 = vadd.s32 %v961, 127
    %v963 = vshll.u32 %v962, 23
    %v964 = vor.u32 4788187, %v963
    %v965 = vand.u32 2147483647, %v964
    %v967 = vcvt.s32.f32 %v960
    %v968 = vmul.f32 %v967, %v965
    %v969 = vxor.u32 %v968, 2147483648
    %v970 = vsel %vm849, %v969, %v968
    %v971 = vsub.s32 4, %v947
    %v972 = vsel %vm849, %v971, %v947
    %v973 = vsel %vm848, %v689, %v970
    %v974 = vsel %vm848, 0, %v972
    %v975 = vmul.f32 %v973, %v973
    %v976 = vmul.f32 %v975, -0.001358992
    %v977 = vadd.f32 %v976, 0.041655596
    %v978 = vmul.f32 %v975, %v977
    %v979 = vadd.f32 %v978, -0.4999988
    %v980 = vmul.f32 %v975, %v979
    %v981 = vadd.f32 1.0, %v980
    %v982 = vmul.f32 %v973, %v973
    %v983 = vmul.f32 %v982, -0.00019511016
    %v984 = vadd.f32 %v983, 0.008332121
    %v985 = vmul.f32 %v982, %v984
    %v986 = vadd.f32 %v985, -0.16666654
    %v987 = vmul.f32 %v982, %v986
    %v988 = vadd.f32 %v987, 1.0
    %v989 = vmul.f32 %v988, %v973
    %vm990 = vweird.f32 %v689
    %v991 = vadd.s32 %v974, 3
    %v992 = vand.u32 %v991, 3
    %vm993 = vcmp.lt.s32.totalorder %v992, 2
    %vm994 = vcmp.eq.s32.totalorder %v992, 0
    %v995 = vxor.u32 %v989, 2147483648
    %v996 = vsel %vm994, %v981, %v995
    %vm997 = vcmp.eq.s32.totalorder %v992, 2
    %v998 = vxor.u32 %v981, 2147483648
    %v999 = vsel %vm997, %v998, %v989
    %v1000 = vsel %vm993, %v996, %v999
    %v1001 = vsel %vm990, nan, %v1000
    %v1002 = vand.u32 2147483647, %v690
    %vm1003 = vcmp.le.f32.partialorder %v1002, 0.7853982
    %vm1004 = vcmp.lt.s32.totalorder %v690, 0
    %v1005 = vand.u32 %v690, 2139095040
    %v1006 = vshrl.u32 %v1005, 23
    %v1007 = vsub.s32 %v1006, 127
    %v1008 = vand.u32 2147483647, %v690
    %v1009 = vand.u32 %v1008, 8388607
    %v1010 = vor.u32 %v1009, 8388608
    %v1011 = vsub.s32 0, %v1010
    %v1012 = vadd.s32 %v1007, 1
    %vm1013 = vcmp.gt.s32.totalorder %v1012, 0
    %v1014 = vsel %vm1013, %v1012, 0
    %v1015 = vshrl.u32 %v1014, 5
    %v1016 = vand.u32 %v1014, 31
    %v1017 = vsub.s32 32, %v1016
    %v1018 = vshrl.u32 683565275, %v1017
    %v1019 = vshll.u32 683565275, %v1016
    %v1020 = vshrl.u32 2475754826, %v1017
    %v1021 = vor.u32 %v1019, %v1020
    %v1022 = vshll.u32 2475754826, %v1016
    %v1023 = vshrl.u32 2131351028, %v1017
    %v1024 = vor.u32 %v1022, %v1023
    %v1025 = vshll.u32 2131351028, %v1016
    %v1026 = vshrl.u32 2102212464, %v1017
    %v1027 = vor.u32 %v1025, %v1026
    %v1028 = vshll.u32 2102212464, %v1016
    %v1029 = vshrl.u32 920167782, %v1017
    %v1030 = vor.u32 %v1028, %v1029
    %v1031 = vshll.u32 920167782, %v1016
    %v1032 = vshrl.u32 1326507024, %v1017
    %v1033 = vor.u32 %v1031, %v1032
    %vm1034 = vcmp.lt.s32.totalorder %v1015, 1
    %vm1035 = vcmp.lt.s32.totalorder %v1015, 2
    %vm1036 = vcmp.lt.s32.totalorder %v1015, 3
    %vm1037 = vcmp.lt.s32.totalorder %v1015, 4
    %v1038 = vsel %vm1034, %v1018, %v1021
    %v1039 = vsel %vm1037, %v1027, 2102212464
    %v1040 = vsel %vm1036, %v1024, %v1039
    %v1041 = vsel %vm1035, %v1038, %v1040
    %v1042 = vsel %vm1034, %v1021, %v1024
    %v1043 = vsel %vm1037, %v1030, 920167782
    %v1044 = vsel %vm1036, %v1027, %v1043
    %v1045 = vsel %vm1035, %v1042, %v1044
    %v1046 = vsel %vm1034, %v1024, %v1027
    %v1047 = vsel %vm1037, %v1033, 1326507024
    %v1048 = vsel %vm1036, %v1030, %v1047
    %v1049 = vsel %vm1035, %v1046, %v1048
    %v1050 = vshll.u32 %v1010, 8
    %v1051 = vand.u32 %v1050, 65535
    %v1052 = vshrl.u32 %v1050, 16
    %v1053 = vand.u32 %v1049, 65535
    %v1054 = vshrl.u32 %v1049, 16
    %v1055 = vmul.u32 %v1051, %v1053
    %v1056 = vmul.u32 %v1051, %v1054
    %v1057 = vmul.u32 %v1052, %v1053
    %v1058 = vmul.u32 %v1052, %v1054
    %v1059 = vshll.u32 %v1056, 16
    %v1060 = vshrl.u32 %v1056, 16
    %v1061 = vshll.u32 %v1057, 16
    %v1062 = vshrl.u32 %v1057, 16
    %vm1063 = vc.u32 %v1055, %v1059
    %v1064 = vsel %vm1063, 1, 0
    %v1065 = vadd.s32 %v1055, %v1059
    %v1066 = vadd.s32 %v1058, %v1064
    %vm1067 = vc.u32 %v1065, %v1061
    %v1068 = vsel %vm1067, 1, 0
    %v1069 = vadd.s32 %v1065, %v1061
    %v1070 = vadd.s32 %v1066, %v1068
    %v1071 = vadd.s32 %v1070, %v1060
    %v1072 = vadd.s32 %v1071, %v1062
    %v1073 = vand.u32 %v1050, 65535
    %v1074 = vshrl.u32 %v1050, 16
    %v1075 = vand.u32 %v1045, 65535
    %v1076 = vshrl.u32 %v1045, 16
    %v1077 = vmul.u32 %v1073, %v1075
    %v1078 = vmul.u32 %v1073, %v1076
    %v1079 = vmul.u32 %v1074, %v1075
    %v1080 = vmul.u32 %v1074, %v1076
    %v1081 = vshll.u32 %v1078, 16
    %v1082 = vshrl.u32 %v1078, 16
    %v1083 = vshll.u32 %v1079, 16
    %v1084 = vshrl.u32 %v1079, 16
    %vm1085 = vc.u32 %v1077, %v1081
    %v1086 = vsel %vm1085, 1, 0
    %v1087 = vadd.s32 %v1077, %v1081
    %v1088 = vadd.s32 %v1080, %v1086
    %vm1089 = vc.u32 %v1087, %v1083
    %v1090 = vsel %vm1089, 1, 0
    %v1091 = vadd.s32 %v1087, %v1083
    %v1092 = vadd.s32 %v1088, %v1090
    %v1093 = vadd.s32 %v1092, %v1082
    %v1094 = vadd.s32 %v1093, %v1084
    %v1095 = vmul.u32 %v1050, %v1041
    %v1096 = vadd.s32 %v1072, %v1091
    %vm1097 = vc.u32 %v1072, %v1091
    %v1098 = vadd.s32 %v1094, 1
    %v1099 = vsel %vm1097, %v1098, %v1094
    %v1100 = vadd.s32 %v1095, %v1099
    %v1101 = vadd.s32 %v1100, 536870912
    %v1102 = vshrl.u32 %v1101, 30
    %v1103 = vshll.u32 %v1102, 30
    %v1104 = vsub.s32 %v1100, %v1103
    %vm1105 = vcmp.lt.s32.totalorder %v1104, 0
    %v1106 = vsub.s32 0, %v1104
    %v1107 = vsel %vm1105, %v1106, %v1104
    %v1108 = vclz %v1107
    %v1109 = vsub.s32 %v1108, 2
    %vm1110 = vcmp.gt.s32.totalorder 0, %v1109
    %v1111 = vsel %vm1110, 0, %v1109
    %v1112 = vsub.s32 32, %v1111
    %v1113 = vshll.u32 %v1104, %v1111
    %v1114 = vshrl.u32 %v1096, %v1112
    %v1115 = vor.u32 %v1113, %v1114
    %v1116 = vsub.s32 4294967266, %v1111
    %v1117 = vadd.s32 %v1116, 127
    %v1118 = vshll.u32 %v1117, 23
    %v1119 = vor.u32 4788187, %v1118
    %v1120 = vand.u32 2147483647, %v1119
    %v1122 = vcvt.s32.f32 %v1115
    %v1123 = vmul.f32 %v1122, %v1120
    %v1124 = vxor.u32 %v1123, 2147483648
    %v1125 = vsel %vm1004, %v1124, %v1123
    %v1126 = vsub.s32 4, %v1102
    %v1127 = vsel %vm1004, %v1126, %v1102
    %v1128 = vsel %vm1003, %v690, %v1125
    %v1129 = vsel %vm1003, 0, %v1127
    %v1130 = vmul.f32 %v1128, %v1128
    %v1131 = vmul.f32 %v1130, -0.001358992
    %v1132 = vadd.f32 %v1131, 0.041655596
    %v1133 = vmul.f32 %v1130, %v1132
    %v1134 = vadd.f32 %v1133, -0.4999988
    %v1135 = vmul.f32 %v1130, %v1134
    %v1136 = vadd.f32 1.0, %v1135
    %v1137 = vmul.f32 %v1128, %v1128
    %v1138 = vmul.f32 %v1137, -0.00019511016
    %v1139 = vadd.f32 %v1138, 0.008332121
    %v1140 = vmul.f32 %v1137, %v1139
    %v1141 = vadd.f32 %v1140, -0.16666654
    %v1142 = vmul.f32 %v1137, %v1141
    %v1143 = vadd.f32 %v1142, 1.0
    %v1144 = vmul.f32 %v1143, %v1128
    %vm1145 = vweird.f32 %v690
    %v1146 = vadd.s32 %v1129, 3
    %v1147 = vand.u32 %v1146, 3
    %vm1148 = vcmp.lt.s32.totalorder %v1147, 2
    %vm1149 = vcmp.eq.s32.totalorder %v1147, 0
    %v1150 = vxor.u32 %v1144, 2147483648
    %v1151 = vsel %vm1149, %v1136, %v1150
    %vm1152 = vcmp.eq.s32.totalorder %v1147, 2
    %v1153 = vxor.u32 %v1136, 2147483648
    %v1154 = vsel %vm1152, %v1153, %v1144
    %v1155 = vsel %vm1148, %v1151, %v1154
    %v1156 = vsel %vm1145, nan, %v1155
    %v1157 = vand.u32 2147483647, %v691
    %vm1158 = vcmp.le.f32.partialorder %v1157, 0.7853982
    %vm1159 = vcmp.lt.s32.totalorder %v691, 0
    %v1160 = vand.u32 %v691, 2139095040
    %v1161 = vshrl.u32 %v1160, 23
    %v1162 = vsub.s32 %v1161, 127
    %v1163 = vand.u32 2147483647, %v691
    %v1164 = vand.u32 %v1163, 8388607
    %v1165 = vor.u32 %v1164, 8388608
    %v1166 = vsub.s32 0, %v1165
    %v1167 = vadd.s32 %v1162, 1
    %vm1168 = vcmp.gt.s32.totalorder %v1167, 0
    %v1169 = vsel %vm1168, %v1167, 0
    %v1170 = vshrl.u32 %v1169, 5
    %v1171 = vand.u32 %v1169, 31
    %v1172 = vsub.s32 32, %v1171
    %v1173 = vshrl.u32 683565275, %v1172
    %v1174 = vshll.u32 683565275, %v1171
    %v1175 = vshrl.u32 2475754826, %v1172
    %v1176 = vor.u32 %v1174, %v1175
    %v1177 = vshll.u32 2475754826, %v1171
    %v1178 = vshrl.u32 2131351028, %v1172
    %v1179 = vor.u32 %v1177, %v1178
    %v1180 = vshll.u32 2131351028, %v1171
    %v1181 = vshrl.u32 2102212464, %v1172
    %v1182 = vor.u32 %v1180, %v1181
    %v1183 = vshll.u32 2102212464, %v1171
    %v1184 = vshrl.u32 920167782, %v1172
    %v1185 = vor.u32 %v1183, %v1184
    %v1186 = vshll.u32 920167782, %v1171
    %v1187 = vshrl.u32 1326507024, %v1172
    %v1188 = vor.u32 %v1186, %v1187
    %vm1189 = vcmp.lt.s32.totalorder %v1170, 1
    %vm1190 = vcmp.lt.s32.totalorder %v1170, 2
    %vm1191 = vcmp.lt.s32.totalorder %v1170, 3
    %vm1192 = vcmp.lt.s32.totalorder %v1170, 4
    %v1193 = vsel %vm1189, %v1173, %v1176
    %v1194 = vsel %vm1192, %v1182, 2102212464
    %v1195 = vsel %vm1191, %v1179, %v1194
    %v1196 = vsel %vm1190, %v1193, %v1195
    %v1197 = vsel %vm1189, %v1176, %v1179
    %v1198 = vsel %vm1192, %v1185, 920167782
    %v1199 = vsel %vm1191, %v1182, %v1198
    %v1200 = vsel %vm1190, %v1197, %v1199
    %v1201 = vsel %vm1189, %v1179, %v1182
    %v1202 = vsel %vm1192, %v1188, 1326507024
    %v1203 = vsel %vm1191, %v1185, %v1202
    %v1204 = vsel %vm1190, %v1201, %v1203
    %v1205 = vshll.u32 %v1165, 8
    %v1206 = vand.u32 %v1205, 65535
    %v1207 = vshrl.u32 %v1205, 16
    %v1208 = vand.u32 %v1204, 65535
    %v1209 = vshrl.u32 %v1204, 16
    %v1210 = vmul.u32 %v1206, %v1208
    %v1211 = vmul.u32 %v1206, %v1209
    %v1212 = vmul.u32 %v1207, %v1208
    %v1213 = vmul.u32 %v1207, %v1209
    %v1214 = vshll.u32 %v1211, 16
    %v1215 = vshrl.u32 %v1211, 16
    %v1216 = vshll.u32 %v1212, 16
    %v1217 = vshrl.u32 %v1212, 16
    %vm1218 = vc.u32 %v1210, %v1214
    %v1219 = vsel %vm1218, 1, 0
    %v1220 = vadd.s32 %v1210, %v1214
    %v1221 = vadd.s32 %v1213, %v1219
    %vm1222 = vc.u32 %v1220, %v1216
    %v1223 = vsel %vm1222, 1, 0
    %v1224 = vadd.s32 %v1220, %v1216
    %v1225 = vadd.s32 %v1221, %v1223
    %v1226 = vadd.s32 %v1225, %v1215
    %v1227 = vadd.s32 %v1226, %v1217
    %v1228 = vand.u32 %v1205, 65535
    %v1229 = vshrl.u32 %v1205, 16
    %v1230 = vand.u32 %v1200, 65535
    %v1231 = vshrl.u32 %v1200, 16
    %v1232 = vmul.u32 %v1228, %v1230
    %v1233 = vmul.u32 %v1228, %v1231
    %v1234 = vmul.u32 %v1229, %v1230
    %v1235 = vmul.u32 %v1229, %v1231
    %v1236 = vshll.u32 %v1233, 16
    %v1237 = vshrl.u32 %v1233, 16
    %v1238 = vshll.u32 %v1234, 16
    %v1239 = vshrl.u32 %v1234, 16
    %vm1240 = vc.u32 %v1232, %v1236
    %v1241 = vsel %vm1240, 1, 0
    %v1242 = vadd.s32 %v1232, %v1236
    %v1243 = vadd.s32 %v1235, %v1241
    %vm1244 = vc.u32 %v1242, %v1238
    %v1245 = vsel %vm1244, 1, 0
    %v1246 = vadd.s32 %v1242, %v1238
    %v1247 = vadd.s32 %v1243, %v1245
    %v1248 = vadd.s32 %v1247, %v1237
    %v1249 = vadd.s32 %v1248, %v1239
    %v1250 = vmul.u32 %v1205, %v1196
    %v1251 = vadd.s32 %v1227, %v1246
    %vm1252 = vc.u32 %v1227, %v1246
    %v1253 = vadd.s32 %v1249, 1
    %v1254 = vsel %vm1252, %v1253, %v1249
    %v1255 = vadd.s32 %v1250, %v1254
    %v1256 = vadd.s32 %v1255, 536870912
    %v1257 = vshrl.u32 %v1256, 30
    %v1258 = vshll.u32 %v1257, 30
    %v1259 = vsub.s32 %v1255, %v1258
    %vm1260 = vcmp.lt.s32.totalorder %v1259, 0
    %v1261 = vsub.s32 0, %v1259
    %v1262 = vsel %vm1260, %v1261, %v1259
    %v1263 = vclz %v1262
    %v1264 = vsub.s32 %v1263, 2
    %vm1265 = vcmp.gt.s32.totalorder 0, %v1264
    %v1266 = vsel %vm1265, 0, %v1264
    %v1267 = vsub.s32 32, %v1266
    %v1268 = vshll.u32 %v1259, %v1266
    %v1269 = vshrl.u32 %v1251, %v1267
    %v1270 = vor.u32 %v1268, %v1269
    %v1271 = vsub.s32 4294967266, %v1266
    %v1272 = vadd.s32 %v1271, 127
    %v1273 = vshll.u32 %v1272, 23
    %v1274 = vor.u32 4788187, %v1273
    %v1275 = vand.u32 2147483647, %v1274
    %v1277 = vcvt.s32.f32 %v1270
    %v1278 = vmul.f32 %v1277, %v1275
    %v1279 = vxor.u32 %v1278, 2147483648
    %v1280 = vsel %vm1159, %v1279, %v1278
    %v1281 = vsub.s32 4, %v1257
    %v1282 = vsel %vm1159, %v1281, %v1257
    %v1283 = vsel %vm1158, %v691, %v1280
    %v1284 = vsel %vm1158, 0, %v1282
    %v1285 = vmul.f32 %v1283, %v1283
    %v1286 = vmul.f32 %v1285, -0.001358992
    %v1287 = vadd.f32 %v1286, 0.041655596
    %v1288 = vmul.f32 %v1285, %v1287
    %v1289 = vadd.f32 %v1288, -0.4999988
    %v1290 = vmul.f32 %v1285, %v1289
    %v1291 = vadd.f32 1.0, %v1290
    %v1292 = vmul.f32 %v1283, %v1283
    %v1293 = vmul.f32 %v1292, -0.00019511016
    %v1294 = vadd.f32 %v1293, 0.008332121
    %v1295 = vmul.f32 %v1292, %v1294
    %v1296 = vadd.f32 %v1295, -0.16666654
    %v1297 = vmul.f32 %v1292, %v1296
    %v1298 = vadd.f32 %v1297, 1.0
    %v1299 = vmul.f32 %v1298, %v1283
    %vm1300 = vweird.f32 %v691
    %v1301 = vadd.s32 %v1284, 3
    %v1302 = vand.u32 %v1301, 3
    %vm1303 = vcmp.lt.s32.totalorder %v1302, 2
    %vm1304 = vcmp.eq.s32.totalorder %v1302, 0
    %v1305 = vxor.u32 %v1299, 2147483648
    %v1306 = vsel %vm1304, %v1291, %v1305
    %vm1307 = vcmp.eq.s32.totalorder %v1302, 2
    %v1308 = vxor.u32 %v1291, 2147483648
    %v1309 = vsel %vm1307, %v1308, %v1299
    %v1310 = vsel %vm1303, %v1306, %v1309
    %v1311 = vsel %vm1300, nan, %v1310
    %1312 = vst [vmem:[#allocation2 + $0x20] sm:$0xff] %v846
    %1313 = vst [vmem:[#allocation2 + $0x28] sm:$0xff] %v1001
    %1314 = vst [vmem:[#allocation2 + $0x30] sm:$0xff] %v1156
    %1315 = vst [vmem:[#allocation2 + $0x38] sm:$0xff] %v1311
    // Predicated region
    $region14: #{tpu_custom_call.1} parent=1 // pred_check
      _
    $region15: #{tpu_custom_call.1} parent=1 // pred_check_branch
      %1317 = sbr.rel (0) target = $region17
    $region16: #{tpu_custom_call.1} parent=1 // pred_region
      %1319 = vsyncadd [#allocation3], 0
      %s1320 = sshll.u32 [#allocation2], 4
      %s1321 = int_to_ptr.vmem [resolvable:$true] %s1320
      %s1322 = sshll.u32 %s3, 4
      %s1323 = int_to_ptr.hbm [resolvable:$true] %s1322
      %1328 = dma.vmem_to_hbm [thread:$0]  %s1321, 1024, %s1323, [#allocation3], 256, 256, 16
    $region17: #{tpu_custom_call.1} parent=1 // pred_fallthru
      _
    // Predicated region
    $region18: #{tpu_custom_call.1} parent=1 // pred_check
      _
    $region19: #{tpu_custom_call.1} parent=1 // pred_check_branch
      %1330 = sbr.rel (0) target = $region21
    $region20: #{tpu_custom_call.1} parent=1 // pred_region
      %1332 = dma.done [#allocation3], 1024
    $region21: #{tpu_custom_call.1} parent=1 // pred_fallthru
      _
    %1333 = vsyncpa [#allocation3], 1

</llo_original>
